<compile_context>
chip_gen: v7x
topology: tpu7x:2x2x1
jax: 0.10.0
libtpu: 0.0.40
codegen_flags: <defaults>
</compile_context>

<pallas_src>
import functools

import jax
import jax.numpy as jnp
from jax.experimental import pallas as pl
from jax.experimental.pallas import tpu as pltpu


def _round_up(x: int, m: int) -> int:
    return ((x + m - 1) // m) * m


def _footprint_bytes(tm: int, tn: int, tk: int, in_isz: int, out_isz: int) -> int:
    """Double-buffered VMEM footprint of one grid step."""
    x_t = tm * tk * in_isz
    w_t = tk * tn * in_isz
    b_t = tn * in_isz
    o_t = tm * tn * out_isz
    acc = tm * tn * 4
    return 2 * (x_t + w_t + b_t + o_t) + acc


def conv1d_kernel(x_ref, w_ref, b_ref, o_ref, acc_ref):
    """One (TM, TN) output tile; accumulate over the K grid axis (often size 1)."""
    k = pl.program_id(2)

    @pl.when(k == 0)
    def _init():
        # Seed the accumulator with the broadcast bias so finalize is cast+store.
        acc_ref[...] = jnp.broadcast_to(
            b_ref[...].astype(jnp.float32), acc_ref.shape
        )

    # MXU matmul with f32 accumulation (matches torch.addmm math).
    acc_ref[...] += jnp.dot(
        x_ref[...], w_ref[...], preferred_element_type=jnp.float32
    )

    @pl.when(k == pl.num_programs(2) - 1)
    def _finalize():
        o_ref[...] = acc_ref[...].astype(o_ref.dtype)


@functools.partial(jax.jit, static_argnames=("mxu_dtype", "vmem_budget_bytes"))
def conv1d(x, w, b, *, mxu_dtype=None, vmem_budget_bytes=28 * 1024 * 1024):
    """Pallas implementation of Conv1D.forward (rf == 1).

    x: [..., nx]   w: [nx, nf]   b: [nf]   ->   [..., nf]

    mxu_dtype: optional operand dtype for the MXU (e.g. jnp.bfloat16).  Default
      None keeps operands in their original dtype (exact torch.addmm semantics
      for f32 inputs).  The accumulator is always f32; output dtype == x.dtype.
    """
    nx = x.shape[-1]
    nf = w.shape[-1]
    lead = x.shape[:-1]
    out_dtype = x.dtype

    x2 = x.reshape(-1, nx)
    if mxu_dtype is not None:
        x2 = x2.astype(mxu_dtype)
        w = w.astype(mxu_dtype)
    m = x2.shape[0]

    in_isz = x2.dtype.itemsize
    out_isz = jnp.dtype(out_dtype).itemsize

    # ---------------- Tile selection (trace-time, shapes are static) --------
    # M: split into <=512-row tiles of roughly equal size, 16-aligned (works
    # for both f32 and bf16 sublane packing).  Small M => single tile
    # (decode-shaped fast path: one weight-streaming pass).
    n_m_tiles = -(-m // 512)
    tm = _round_up(-(-m // n_m_tiles), 16)

    # N: one lane-aligned tile when nf is modest (minimal padding, weight
    # column streamed once), else 512/256-wide tiles (full MXU width on
    # v6e/v7x) chosen to avoid extra column padding.
    nf128 = _round_up(nf, 128)
    if nf128 <= 1024:
        tn = nf128
    elif nf128 % 512 == 0:
        tn = 512
    elif nf128 % 256 == 0:
        tn = 256
    else:
        tn = 128

    # K: take the full (lane-aligned) reduction in one grid step whenever the
    # double-buffered footprint fits the VMEM budget, so the weight block index
    # is (0, j) and the weight tile stays resident across the whole M sweep.
    # Otherwise chunk K by multiples of 512 and carry the f32 accumulator.
    kp = _round_up(nx, 128)
    tk = kp
    while _footprint_bytes(tm, tn, tk, in_isz, out_isz) > vmem_budget_bytes and tk > 512:
        tk = max(512, (tk // 2 // 512) * 512)
    kp = _round_up(nx, tk)

    mp = _round_up(m, tm)
    np_ = _round_up(nf, tn)

    # Zero padding: K padding is required for reduction correctness; M/N
    # padding is at most one tile remainder and is sliced off afterwards.
    # TODO(synk): for a fixed-parameter module, pre-pad w/b once outside the
    # per-call hot path instead of padding on every call.
    if (mp, kp) != (m, nx):
        x2 = jnp.pad(x2, ((0, mp - m), (0, kp - nx)))
    w_p = w if (kp, np_) == (nx, nf) else jnp.pad(w, ((0, kp - nx), (0, np_ - nf)))
    b_p = b if np_ == nf else jnp.pad(b, (0, np_ - nf))
    b2 = b_p.reshape(1, np_)  # 2D for TPU lane layout

    grid = (np_ // tn, mp // tm, kp // tk)  # (N, M, K) — K innermost reduction
    n_j, n_i, n_k = grid

    # Advisory cost estimate reflecting the actual DMA pattern: x is re-read
    # once per N tile; w is streamed once total when K-grid == 1 (resident
    # across the M sweep), else once per M tile.
    cost = pl.CostEstimate(
        flops=2 * mp * np_ * kp,
        transcendentals=0,
        bytes_accessed=(
            n_j * mp * kp * in_isz
            + (1 if n_k == 1 else n_i) * kp * np_ * in_isz
            + np_ * in_isz
            + mp * np_ * out_isz
        ),
    )

    fp = _footprint_bytes(tm, tn, tk, in_isz, out_isz)
    # Above v5e's 16 MiB scoped default, below v7x's 64 MiB physical VMEM.
    vmem_limit = min(48 * 1024 * 1024, max(32 * 1024 * 1024, int(fp * 3 // 2)))

    out = pl.pallas_call(
        conv1d_kernel,
        out_shape=jax.ShapeDtypeStruct((mp, np_), out_dtype),
        grid_spec=pltpu.PrefetchScalarGridSpec(
            num_scalar_prefetch=0,
            grid=grid,
            in_specs=[
                pl.BlockSpec((tm, tk), lambda j, i, k: (i, k)),   # x tile
                pl.BlockSpec((tk, tn), lambda j, i, k: (k, j)),   # w tile
                pl.BlockSpec((1, tn), lambda j, i, k: (0, j)),    # bias slice
            ],
            out_specs=pl.BlockSpec((tm, tn), lambda j, i, k: (i, j)),
            scratch_shapes=[pltpu.VMEM((tm, tn), jnp.float32)],
        ),
        compiler_params=pltpu.CompilerParams(
            dimension_semantics=("parallel", "parallel", "arbitrary"),
            vmem_limit_bytes=vmem_limit,
        ),
        cost_estimate=cost,
    )(x2, w_p, b2)

    out = out[:m, :nf]
    return out.reshape(lead + (nf,))


if __name__ == "__main__":
    # Module hyper-params (rf must be 1, per the PyTorch module).
    nx = 32   # input feature size
    nf = 64   # output feature size
    batch, seq = 2, 8

    key = jax.random.PRNGKey(0)
    kx, kw = jax.random.split(key)

    # Deterministic parameter init matching nn.init.normal_(w, std=0.02), b = 0.
    w = 0.02 * jax.random.normal(kw, (nx, nf), dtype=jnp.float32)
    b = jnp.zeros((nf,), dtype=jnp.float32)

    x = jax.random.normal(kx, (batch, seq, nx), dtype=jnp.float32)

    out = jax.block_until_ready(conv1d(x, w, b))

    # Reference check against plain JAX (same math as torch.addmm).
    ref = x.reshape(-1, nx) @ w + b
    ref = ref.reshape(batch, seq, nf)
    assert out.shape == (batch, seq, nf)
    assert jnp.allclose(out, ref, atol=1e-5, rtol=1e-5)

    # Ragged / larger shape: exercises the tiled + padded (M, N) path.
    kx2, kw2 = jax.random.split(kw)
    nx2, nf2, m2 = 300, 520, 1000   # not multiples of (8, 128) or tile sizes
    x_big = jax.random.normal(kx2, (m2, nx2), dtype=jnp.float32)
    w_big = 0.02 * jax.random.normal(kw2, (nx2, nf2), dtype=jnp.float32)
    b_big = jnp.linspace(-1.0, 1.0, nf2, dtype=jnp.float32)
    out_big = jax.block_until_ready(conv1d(x_big, w_big, b_big))
    ref_big = x_big @ w_big + b_big
    assert jnp.allclose(out_big, ref_big, atol=1e-4, rtol=1e-4)

    # Force the chunked-K (K grid > 1) fallback path with a tiny VMEM budget.
    kx3, kw3 = jax.random.split(kw2)
    x_k = jax.random.normal(kx3, (256, 1536), dtype=jnp.float32)
    w_k = 0.02 * jax.random.normal(kw3, (1536, 512), dtype=jnp.float32)
    b_k = jnp.linspace(-0.5, 0.5, 512, dtype=jnp.float32)
    out_k = jax.block_until_ready(
        conv1d(x_k, w_k, b_k, vmem_budget_bytes=4 * 1024 * 1024)
    )
    ref_k = x_k @ w_k + b_k
    assert jnp.allclose(out_k, ref_k, atol=1e-4, rtol=1e-4)

    # Optional bf16-MXU operand path (f32 accumulation, looser tolerance).
    out_bf = jax.block_until_ready(conv1d(x_big, w_big, b_big, mxu_dtype=jnp.bfloat16))
    assert jnp.allclose(out_bf, ref_big, atol=2e-2, rtol=2e-2)

    print("KERNEL_OK")
</pallas_src>

<mosaic_0001>
module attributes {stable_mosaic.version = 11 : i64} {
  func.func @conv1d_kernel(%arg0: i32, %arg1: i32, %arg2: i32, %arg3: memref<16x128xf32, #tpu.memory_space<vmem>>, %arg4: memref<128x128xf32, #tpu.memory_space<vmem>>, %arg5: memref<1x128xf32, #tpu.memory_space<vmem>>, %arg6: memref<16x128xf32, #tpu.memory_space<vmem>>, %arg7: memref<16x128xf32, #tpu.memory_space<vmem>>) attributes {dimension_semantics = [#tpu.dimension_semantics<parallel>, #tpu.dimension_semantics<parallel>, #tpu.dimension_semantics<arbitrary>], iteration_bounds = array<i64: 1, 1, 1>, scalar_prefetch = 0 : i64, scratch_operands = 1 : i64, tpu.core_type = #tpu.core_type<tc>, window_params = [{transform_indices = @transform_0, window_bounds = array<i64: 16, 128>}, {transform_indices = @transform_1, window_bounds = array<i64: 128, 128>}, {transform_indices = @transform_2, window_bounds = array<i64: 1, 128>}, {transform_indices = @transform_3, window_bounds = array<i64: 16, 128>}]} {
    %c0_i32 = arith.constant 0 : i32
    %0 = arith.cmpi eq, %arg2, %c0_i32 : i32
    %1 = arith.extui %0 : i1 to i32
    %c0_i32_0 = arith.constant 0 : i32
    %2 = arith.cmpi ne, %1, %c0_i32_0 : i32
    scf.if %2 {
      %c0_10 = arith.constant 0 : index
      %c0_11 = arith.constant 0 : index
      %12 = vector.load %arg5[%c0_10, %c0_11] : memref<1x128xf32, #tpu.memory_space<vmem>>, vector<1x128xf32>
      %13 = vector.shape_cast %12 : vector<1x128xf32> to vector<1x128xf32>
      %14 = vector.broadcast %13 : vector<1x128xf32> to vector<16x128xf32>
      %c0_12 = arith.constant 0 : index
      %c0_13 = arith.constant 0 : index
      %15 = vector.load %arg7[%c0_12, %c0_13] : memref<16x128xf32, #tpu.memory_space<vmem>>, vector<16x128xf32>
      tpu.vector_store %arg7[%c0_12, %c0_13], %14 {strides = array<i32>} : memref<16x128xf32, #tpu.memory_space<vmem>>, vector<16x128xf32>,
    } else {
    }
    %c0 = arith.constant 0 : index
    %c0_1 = arith.constant 0 : index
    %3 = vector.load %arg7[%c0, %c0_1] : memref<16x128xf32, #tpu.memory_space<vmem>>, vector<16x128xf32>
    %c0_2 = arith.constant 0 : index
    %c0_3 = arith.constant 0 : index
    %4 = vector.load %arg3[%c0_2, %c0_3] : memref<16x128xf32, #tpu.memory_space<vmem>>, vector<16x128xf32>
    %c0_4 = arith.constant 0 : index
    %c0_5 = arith.constant 0 : index
    %5 = vector.load %arg4[%c0_4, %c0_5] : memref<128x128xf32, #tpu.memory_space<vmem>>, vector<128x128xf32>
    %cst = arith.constant dense<0.000000e+00> : vector<16x128xf32>
    %6 = tpu.matmul %4, %5, %cst {dimension_numbers = #tpu.dot_dimension_numbers<[1], [0], [0], [1], [0, 0, 1, 1], [], []>} : vector<16x128xf32>, vector<128x128xf32>, vector<16x128xf32> -> vector<16x128xf32>
    %7 = arith.addf %3, %6 : vector<16x128xf32>
    %c0_6 = arith.constant 0 : index
    %c0_7 = arith.constant 0 : index
    %8 = vector.load %arg7[%c0_6, %c0_7] : memref<16x128xf32, #tpu.memory_space<vmem>>, vector<16x128xf32>
    tpu.vector_store %arg7[%c0_6, %c0_7], %7 {strides = array<i32>} : memref<16x128xf32, #tpu.memory_space<vmem>>, vector<16x128xf32>,
    %c0_i32_8 = arith.constant 0 : i32
    %9 = arith.cmpi eq, %arg2, %c0_i32_8 : i32
    %10 = arith.extui %9 : i1 to i32
    %c0_i32_9 = arith.constant 0 : i32
    %11 = arith.cmpi ne, %10, %c0_i32_9 : i32
    scf.if %11 {
      %c0_10 = arith.constant 0 : index
      %c0_11 = arith.constant 0 : index
      %12 = vector.load %arg7[%c0_10, %c0_11] : memref<16x128xf32, #tpu.memory_space<vmem>>, vector<16x128xf32>
      %c0_12 = arith.constant 0 : index
      %c0_13 = arith.constant 0 : index
      %13 = vector.load %arg6[%c0_12, %c0_13] : memref<16x128xf32, #tpu.memory_space<vmem>>, vector<16x128xf32>
      tpu.vector_store %arg6[%c0_12, %c0_13], %12 {strides = array<i32>} : memref<16x128xf32, #tpu.memory_space<vmem>>, vector<16x128xf32>,
    } else {
    }
    return
  }
  func.func @transform_0(%arg0: i32, %arg1: i32, %arg2: i32) -> (i32, i32) {
    %c0_i32 = arith.constant 0 : i32
    return %arg1, %arg2 : i32, i32
  }
  func.func @transform_1(%arg0: i32, %arg1: i32, %arg2: i32) -> (i32, i32) {
    %c0_i32 = arith.constant 0 : i32
    return %arg2, %arg0 : i32, i32
  }
  func.func @transform_2(%arg0: i32, %arg1: i32, %arg2: i32) -> (i32, i32) {
    %c0_i32 = arith.constant 0 : i32
    %c0_i32_0 = arith.constant 0 : i32
    return %c0_i32, %arg0 : i32, i32
  }
  func.func @transform_3(%arg0: i32, %arg1: i32, %arg2: i32) -> (i32, i32) {
    %c0_i32 = arith.constant 0 : i32
    return %arg1, %arg0 : i32, i32
  }
}

</mosaic_0001>

<llo_original>
// kernel: conv1d.1
$region0: #{conv1d.1}
  #allocation0 [shape = 'u32[]', space=smem, size = 0x4, offset = 0x4, fixed_abs, tag = 'smem constant byte address 0x4 - core index']
  #allocation1 [shape = 'u32[144,128]{1,0:T(1,128)}', space=vmem, size = 0x12000, scoped, tag = 'internal scratch']
  #allocation2 [shape = 'f32[16,128]{1,0:T(8,128)}', space=vmem, size = 0x2000, scoped, tag = 'scratch operand']
  %s0 = inlined_call_operand.vmem [shape: f32[16,128], index: 0, kind: input, shape index: {}]
  %s1 = inlined_call_operand.vmem [shape: f32[128,128], index: 1, kind: input, shape index: {}]
  %s2 = inlined_call_operand.vmem [shape: f32[1,128], index: 2, kind: input, shape index: {}]
  %s3 = inlined_call_operand.vmem [shape: f32[16,128], index: 3, kind: output, shape index: {}]
  %s4 = sld [smem:[#allocation0]]
  $region30: #{conv1d.1} parent=0
    _
  %s6 = ssub.s32 1, %s4
  %s7 = scalar_select 0, %s6, %s4
  // Predicated region
  $region2: #{conv1d.1} parent=0 // pred_check
    _
  $region3: #{conv1d.1} parent=0 // pred_check_branch
    %9 = sbr.rel (0) target = $region5
  $region4: #{conv1d.1} parent=0 // pred_region
    _
  $region5: #{conv1d.1} parent=0 // pred_fallthru
    _
  // Predicated region
  $region6: #{conv1d.1} parent=0 // pred_check
    _
  $region7: #{conv1d.1} parent=0 // pred_check_branch
    %11 = sbr.rel (0) target = $region9
  $region8: #{conv1d.1} parent=0 // pred_region
    _
  $region9: #{conv1d.1} parent=0 // pred_fallthru
    _
  // Predicated region
  $region10: #{conv1d.1} parent=0 // pred_check
    _
  $region11: #{conv1d.1} parent=0 // pred_check_branch
    %13 = sbr.rel (0) target = $region13
  $region12: #{conv1d.1} parent=0 // pred_region
    _
  $region13: #{conv1d.1} parent=0 // pred_fallthru
    _
  %p14 = scmp.eq.s32.totalorder 0, 0
  // Predicated region
  $region14: #{conv1d.1} parent=0 // pred_check
    %p15 = pneg %p14
  $region15: #{conv1d.1} parent=0 // pred_check_branch
    %17 = sbr.rel (%p15) target = $region17
  $region16: #{conv1d.1} parent=0 // pred_region
    %v18 = vld [vmem:[%s2] sm:$0x1]
    %v20 = vlaneseq
    %v21 = vshrl.u32 %v20, 7
    %v22 = vsub.s32 0, %v21
    %v23 = vrot.slane %v18, %v22
    %25 = vst [vmem:[#allocation2] sm:$0xff] %v23
    %26 = vst [vmem:[#allocation2 + $0x8] sm:$0xff] %v23
  $region17: #{conv1d.1} parent=0 // pred_fallthru
    _
  %v27 = vld [vmem:[#allocation2] sm:$0xff]
  %v28 = vld [vmem:[#allocation2 + $0x8] sm:$0xff]
  %v29 = vld [vmem:[%s0] sm:$0xff]
  %v30 = vld [vmem:[%s0 + $0x8] sm:$0xff]
  %v31 = vld [vmem:[%s1] sm:$0xff]
  %v32 = vld [vmem:[%s1 + $0x8] sm:$0xff]
  %v33 = vld [vmem:[%s1 + $0x10] sm:$0xff]
  %v34 = vld [vmem:[%s1 + $0x18] sm:$0xff]
  %v35 = vld [vmem:[%s1 + $0x20] sm:$0xff]
  %v36 = vld [vmem:[%s1 + $0x28] sm:$0xff]
  %v37 = vld [vmem:[%s1 + $0x30] sm:$0xff]
  %v38 = vld [vmem:[%s1 + $0x38] sm:$0xff]
  %v39 = vld [vmem:[%s1 + $0x40] sm:$0xff]
  %v40 = vld [vmem:[%s1 + $0x48] sm:$0xff]
  %v41 = vld [vmem:[%s1 + $0x50] sm:$0xff]
  %v42 = vld [vmem:[%s1 + $0x58] sm:$0xff]
  %v43 = vld [vmem:[%s1 + $0x60] sm:$0xff]
  %v44 = vld [vmem:[%s1 + $0x68] sm:$0xff]
  %v45 = vld [vmem:[%s1 + $0x70] sm:$0xff]
  %v46 = vld [vmem:[%s1 + $0x78] sm:$0xff]
  %47 = vmatprep.subr.mxu0 0.0
  %48 = vmatpush1.msra.mxu0 %v31
  %49 = vmatprep.subr.mxu0 0.0
  %50 = vmatpush1.msra.mxu0 %v32
  %51 = vmatprep.subr.mxu0 0.0
  %52 = vmatpush1.msra.mxu0 %v33
  %53 = vmatprep.subr.mxu0 0.0
  %54 = vmatpush1.msra.mxu0 %v34
  %55 = vmatprep.subr.mxu0 0.0
  %56 = vmatpush1.msra.mxu0 %v35
  %57 = vmatprep.subr.mxu0 0.0
  %58 = vmatpush1.msra.mxu0 %v36
  %59 = vmatprep.subr.mxu0 0.0
  %60 = vmatpush1.msra.mxu0 %v37
  %61 = vmatprep.subr.mxu0 0.0
  %62 = vmatpush1.msra.mxu0 %v38
  %63 = vmatprep.subr.mxu0 0.0
  %64 = vmatpush1.msra.mxu0 %v39
  %65 = vmatprep.subr.mxu0 0.0
  %66 = vmatpush1.msra.mxu0 %v40
  %67 = vmatprep.subr.mxu0 0.0
  %68 = vmatpush1.msra.mxu0 %v41
  %69 = vmatprep.subr.mxu0 0.0
  %70 = vmatpush1.msra.mxu0 %v42
  %71 = vmatprep.subr.mxu0 0.0
  %72 = vmatpush1.msra.mxu0 %v43
  %73 = vmatprep.subr.mxu0 0.0
  %74 = vmatpush1.msra.mxu0 %v44
  %75 = vmatprep.subr.mxu0 0.0
  %76 = vmatpush1.msra.mxu0 %v45
  %77 = vmatprep.subr.mxu0 0.0
  %78 = vmatpush1.msra.mxu0 %v46
  %79 = vmatprep.subr.mxu0 0.0
  %80 = vmatpush1.msra.mxu0 0.0
  %81 = vmatprep.subr.mxu0 0.0
  %82 = vmatpush1.msra.mxu0 0.0
  %83 = vmatprep.subr.mxu0 0.0
  %84 = vmatpush1.msra.mxu0 0.0
  %85 = vmatprep.subr.mxu0 0.0
  %86 = vmatpush1.msra.mxu0 0.0
  %87 = vmatprep.subr.mxu0 0.0
  %88 = vmatpush1.msra.mxu0 0.0
  %89 = vmatprep.subr.mxu0 0.0
  %90 = vmatpush1.msra.mxu0 0.0
  %91 = vmatprep.subr.mxu0 0.0
  %92 = vmatpush1.msra.mxu0 0.0
  %93 = vmatprep.subr.mxu0 0.0
  %94 = vmatpush1.msra.mxu0 0.0
  %95 = vmatprep.subr.mxu0 0.0
  %96 = vmatpush1.msra.mxu0 0.0
  %97 = vmatprep.subr.mxu0 0.0
  %98 = vmatpush1.msra.mxu0 0.0
  %99 = vmatprep.subr.mxu0 0.0
  %100 = vmatpush1.msra.mxu0 0.0
  %101 = vmatprep.subr.mxu0 0.0
  %102 = vmatpush1.msra.mxu0 0.0
  %103 = vmatprep.subr.mxu0 0.0
  %104 = vmatpush1.msra.mxu0 0.0
  %105 = vmatprep.subr.mxu0 0.0
  %106 = vmatpush1.msra.mxu0 0.0
  %107 = vmatprep.subr.mxu0 0.0
  %108 = vmatpush1.msra.mxu0 0.0
  %109 = vmatprep.subr.mxu0 0.0
  %110 = vmatpush1.msra.mxu0 0.0
  %111 = vmatprep.mubr.f32.mxu0 0.0
  %112 = vmatmul.mubr.f32.gmra.mrb[0].mxu0 %v29
  %v113 = vpop.f32.mrb[0].mxu0
  %v114 = vadd.f32 0.0, %v113
  %v115 = vpop.f32.mrb[0].mxu0
  %116 = vmatprep.mubr.f32.mxu0 0.0
  %117 = vmatmul.mubr.f32.gmra.mrb[0].mxu0 %v30
  %v118 = vpop.f32.mrb[0].mxu0
  %v119 = vadd.f32 0.0, %v118
  %v120 = vpop.f32.mrb[0].mxu0
  %121 = vdwg.mxu0
  %v122 = vadd.f32 %v27, %v114
  %v123 = vadd.f32 %v28, %v119
  %124 = vst [vmem:[#allocation2] sm:$0xff] %v122
  %125 = vst [vmem:[#allocation2 + $0x8] sm:$0xff] %v123
  // Predicated region
  $region18: #{conv1d.1} parent=0 // pred_check
    %p126 = pneg %p14
  $region19: #{conv1d.1} parent=0 // pred_check_branch
    %128 = sbr.rel (%p126) target = $region21
  $region20: #{conv1d.1} parent=0 // pred_region
    %v129 = vld [vmem:[#allocation2] sm:$0xff]
    %v130 = vld [vmem:[#allocation2 + $0x8] sm:$0xff]
    %131 = vst [vmem:[%s3] sm:$0xff] %v129
    %132 = vst [vmem:[%s3 + $0x8] sm:$0xff] %v130
  $region21: #{conv1d.1} parent=0 // pred_fallthru
    _
  // Predicated region
  $region22: #{conv1d.1} parent=0 // pred_check
    _
  $region23: #{conv1d.1} parent=0 // pred_check_branch
    %134 = sbr.rel (0) target = $region25
  $region24: #{conv1d.1} parent=0 // pred_region
    _
  $region25: #{conv1d.1} parent=0 // pred_fallthru
    _
  // Predicated region
  $region26: #{conv1d.1} parent=0 // pred_check
    _
  $region27: #{conv1d.1} parent=0 // pred_check_branch
    %136 = sbr.rel (0) target = $region29
  $region28: #{conv1d.1} parent=0 // pred_region
    _
  $region29: #{conv1d.1} parent=0 // pred_fallthru
    _

</llo_original>
